<compile_context>
chip_gen: v7x
topology: tpu7x:2x2x1
jax: 0.10.0
libtpu: 0.0.40
codegen_flags: <defaults>
</compile_context>

<pallas_src>
import functools

import jax
import jax.numpy as jnp
from jax.experimental import pallas as pl
from jax.experimental.pallas import tpu as pltpu


def _round_up(x, m):
    return (x + m - 1) // m * m


def _vmem_capacity_bytes():
    try:
        return int(pltpu.get_tpu_info().vmem_capacity_bytes)
    except Exception:
        return 64 * 1024 * 1024  # conservative fallback: v7x per-TensorCore VMEM


def _self_attn_kernel(x_ref, w_ref, b_ref, o_ref, m_sc, l_sc, acc_sc,
                      *, t_total, t_block):
    # x_ref:  (nb, tT, D) input block (native dtype)
    # w_ref:  (1, D)      scorer weight row (f32, lane-major)
    # b_ref:  (1,)        scorer bias scalar in SMEM (f32)
    # o_ref:  (nb, D)     pooled output block (resident across the T grid axis)
    # m_sc, l_sc: (nb, 1) f32 online-softmax state;  acc_sc: (nb, D) f32 accumulator
    t = pl.program_id(1)

    @pl.when(t == 0)
    def _():
        m_sc[...] = jnp.full_like(m_sc, -jnp.inf)
        l_sc[...] = jnp.zeros_like(l_sc)
        acc_sc[...] = jnp.zeros_like(acc_sc)

    # Upcast once; reuse for both the scorer and the pooled multiply.
    x32 = x_ref[...].astype(jnp.float32)                      # (nb, tT, D)
    w = w_ref[0]                                              # (D,) f32

    if t_total % t_block != 0:
        # Ragged last T block: mask out-of-range timesteps. Zeroing x32 keeps
        # any garbage (inf/nan) OOB reads from leaking into valid rows via 0*inf.
        nb = x32.shape[0]
        t_ids = t * t_block + jax.lax.broadcasted_iota(jnp.int32, (nb, t_block), 1)
        valid = t_ids < t_total                               # (nb, tT)
        x32 = jnp.where(valid[:, :, None], x32, 0.0)
        logits = jnp.where(valid, jnp.sum(x32 * w, axis=-1) + b_ref[0], -jnp.inf)
    else:
        # Scorer logits: VPU multiply + lane reduce (no MXU), f32 accumulation.
        logits = jnp.sum(x32 * w, axis=-1) + b_ref[0]         # (nb, tT)

    # Online (numerically stable) softmax over the streamed T axis.
    m_prev = m_sc[...]                                        # (nb, 1)
    m_new = jnp.maximum(m_prev, jnp.max(logits, axis=-1, keepdims=True))
    scale = jnp.exp(m_prev - m_new)                           # (nb, 1)
    p = jnp.exp(logits - m_new)                               # (nb, tT)
    l_sc[...] = scale * l_sc[...] + jnp.sum(p, axis=-1, keepdims=True)
    acc_sc[...] = scale * acc_sc[...] + jnp.sum(p[:, :, None] * x32, axis=1)
    m_sc[...] = m_new

    @pl.when(t == pl.num_programs(1) - 1)
    def _():
        # Exact reciprocal: only (nb, 1) divides, never the binding slot.
        o_ref[...] = (acc_sc[...] * (1.0 / l_sc[...])).astype(o_ref.dtype)


def self_attn(inp, weight, bias):
    """inp: (B, T, D), weight: (D, 1), bias: (1, 1) -> (B, D). Matches SelfAttn.forward."""
    B, T, D = inp.shape
    itemsize = jnp.dtype(inp.dtype).itemsize

    # VMEM budget per generation (v5e/v6e: 128 MiB, v7x: 64 MiB per TC).
    vmem_cap = _vmem_capacity_bytes()
    vmem_limit = min(vmem_cap * 3 // 4, 96 * 1024 * 1024)
    # Per grid step: 2x double-buffered x block (native dtype) + ~2x f32
    # elementwise temporaries of the same shape; leave headroom for output
    # double-buffer, scratch, and compiler spill space.
    usable = vmem_limit * 6 // 10
    bytes_per_elem = 2 * itemsize + 2 * 4
    row_full_t = T * D * bytes_per_elem

    if 8 * row_full_t <= usable:
        # Common case: keep the full T extent resident, size nb to the budget.
        t_block = T
        nb = max(8, (usable // row_full_t) // 8 * 8)
    else:
        # Long T: stream T in sublane-aligned chunks with the online softmax.
        nb = 8
        t_block = max(8, (usable // (8 * D * bytes_per_elem)) // 8 * 8)
        t_block = min(t_block, _round_up(T, 8))

    nb = min(nb, _round_up(B, 8))
    # Keep >= 2 batch blocks when possible so the "parallel" axis can shard
    # across v7x's two TensorCores (no effect on single-TC v5e/v6e).
    if B > 8:
        nb = max(8, min(nb, _round_up((B + 1) // 2, 8)))

    grid = (pl.cdiv(B, nb), pl.cdiv(T, t_block))

    w_row = weight.reshape(1, D).astype(jnp.float32)   # (1, D) lane-major, f32
    b_vec = bias.reshape(1).astype(jnp.float32)        # scalar -> SMEM

    kernel = functools.partial(_self_attn_kernel, t_total=T, t_block=t_block)

    out = pl.pallas_call(
        kernel,
        out_shape=jax.ShapeDtypeStruct((B, D), inp.dtype),
        grid_spec=pltpu.PrefetchScalarGridSpec(
            num_scalar_prefetch=0,
            grid=grid,
            in_specs=[
                # x block; if profiling shows exposed DMA with small blocks,
                # sweep pipeline_mode=pl.Buffered(3) here.
                pl.BlockSpec((nb, t_block, D), lambda b, t: (b, t, 0)),
                pl.BlockSpec((1, D), lambda b, t: (0, 0)),
                pl.BlockSpec(memory_space=pltpu.MemorySpace.SMEM),
            ],
            out_specs=pl.BlockSpec((nb, D), lambda b, t: (b, 0)),
            scratch_shapes=[
                pltpu.VMEM((nb, 1), jnp.float32),   # running max m
                pltpu.VMEM((nb, 1), jnp.float32),   # running denom l
                pltpu.VMEM((nb, D), jnp.float32),   # weighted-sum accumulator
            ],
        ),
        compiler_params=pltpu.CompilerParams(
            dimension_semantics=("parallel", "arbitrary"),
            vmem_limit_bytes=vmem_limit,
        ),
    )(inp, w_row, b_vec)

    return out


def self_attn_ref(inp, weight, bias):
    """Plain-JAX reference matching the PyTorch SelfAttn forward."""
    logits = jnp.einsum("btd,do->bto", inp, weight) + bias[0, 0]     # (B, T, 1)
    scores = jax.nn.softmax(logits, axis=1)                          # (B, T, 1)
    cont = jnp.einsum("bto,btd->bod", scores, inp)[:, 0, :]          # (B, D)
    return cont


if __name__ == "__main__":
    # Small shapes consistent with the module: B subgoals, T low-level steps,
    # D = dhid * 2 (bidirectional LSTM hidden) features per step.
    B, T, D = 2, 8, 32
    key = jax.random.PRNGKey(0)
    k_x, k_w, k_b = jax.random.split(key, 3)

    x = jax.random.normal(k_x, (B, T, D), dtype=jnp.float32)
    # nn.Linear(dhid*2, 1) init: U(-1/sqrt(D), 1/sqrt(D)); deterministic here.
    bound = 1.0 / (D ** 0.5)
    weight = jax.random.uniform(k_w, (D, 1), minval=-bound, maxval=bound,
                                dtype=jnp.float32)
    bias = jax.random.uniform(k_b, (1, 1), minval=-bound, maxval=bound,
                              dtype=jnp.float32)

    out = self_attn(x, weight, bias)
    out = jax.block_until_ready(out)

    ref = self_attn_ref(x, weight, bias)
    assert out.shape == (B, D)
    assert jnp.allclose(out, ref, atol=1e-4, rtol=1e-4), "mismatch vs reference"

    print("KERNEL_OK")
</pallas_src>

<mosaic_0001>
module attributes {stable_mosaic.version = 11 : i64} {
  func.func @_self_attn_kernel(%arg0: i32, %arg1: i32, %arg2: memref<8x8x32xf32, #tpu.memory_space<vmem>>, %arg3: memref<1x32xf32, #tpu.memory_space<vmem>>, %arg4: memref<1xf32, #tpu.memory_space<smem>>, %arg5: memref<8x32xf32, #tpu.memory_space<vmem>>, %arg6: memref<8x1xf32, #tpu.memory_space<vmem>>, %arg7: memref<8x1xf32, #tpu.memory_space<vmem>>, %arg8: memref<8x32xf32, #tpu.memory_space<vmem>>) attributes {dimension_semantics = [#tpu.dimension_semantics<parallel>, #tpu.dimension_semantics<arbitrary>], iteration_bounds = array<i64: 1, 1>, scalar_prefetch = 0 : i64, scratch_operands = 3 : i64, tpu.core_type = #tpu.core_type<tc>, window_params = [{transform_indices = @transform_0, window_bounds = array<i64: 8, 8, 32>}, {pipeline_mode = #tpu.pipeline_mode<synchronous>, transform_indices = @transform_1, window_bounds = array<i64: 1, 32>}, {transform_indices = @transform_2, window_bounds = array<i64: 1>}, {transform_indices = @transform_3, window_bounds = array<i64: 8, 32>}]} {
    %c0_i32 = arith.constant 0 : i32
    %0 = arith.cmpi eq, %arg1, %c0_i32 : i32
    %1 = arith.extui %0 : i1 to i32
    %c0_i32_0 = arith.constant 0 : i32
    %2 = arith.cmpi ne, %1, %c0_i32_0 : i32
    scf.if %2 {
      %cst_23 = arith.constant 0xFF800000 : f32
      %41 = vector.broadcast %cst_23 : f32 to vector<8x1xf32>
      %c0_24 = arith.constant 0 : index
      %c0_25 = arith.constant 0 : index
      %42 = vector.load %arg6[%c0_24, %c0_25] : memref<8x1xf32, #tpu.memory_space<vmem>>, vector<8x1xf32>
      tpu.vector_store %arg6[%c0_24, %c0_25], %41 {strides = array<i32>} : memref<8x1xf32, #tpu.memory_space<vmem>>, vector<8x1xf32>,
      %cst_26 = arith.constant 0.000000e+00 : f32
      %43 = vector.broadcast %cst_26 : f32 to vector<8x1xf32>
      %c0_27 = arith.constant 0 : index
      %c0_28 = arith.constant 0 : index
      %44 = vector.load %arg7[%c0_27, %c0_28] : memref<8x1xf32, #tpu.memory_space<vmem>>, vector<8x1xf32>
      tpu.vector_store %arg7[%c0_27, %c0_28], %43 {strides = array<i32>} : memref<8x1xf32, #tpu.memory_space<vmem>>, vector<8x1xf32>,
      %cst_29 = arith.constant 0.000000e+00 : f32
      %45 = vector.broadcast %cst_29 : f32 to vector<8x32xf32>
      %c0_30 = arith.constant 0 : index
      %c0_31 = arith.constant 0 : index
      %46 = vector.load %arg8[%c0_30, %c0_31] : memref<8x32xf32, #tpu.memory_space<vmem>>, vector<8x32xf32>
      tpu.vector_store %arg8[%c0_30, %c0_31], %45 {strides = array<i32>} : memref<8x32xf32, #tpu.memory_space<vmem>>, vector<8x32xf32>,
    } else {
    }
    %c0 = arith.constant 0 : index
    %c0_1 = arith.constant 0 : index
    %c0_2 = arith.constant 0 : index
    %3 = vector.load %arg2[%c0, %c0_1, %c0_2] : memref<8x8x32xf32, #tpu.memory_space<vmem>>, vector<8x8x32xf32>
    %c0_3 = arith.constant 0 : index
    %c0_4 = arith.constant 0 : index
    %4 = vector.load %arg3[%c0_3, %c0_4] : memref<1x32xf32, #tpu.memory_space<vmem>>, vector<1x32xf32>
    %5 = vector.shape_cast %4 : vector<1x32xf32> to vector<32xf32>
    %6 = vector.shape_cast %5 : vector<32xf32> to vector<1x1x32xf32>
    %7 = vector.broadcast %6 : vector<1x1x32xf32> to vector<8x8x32xf32>
    %8 = arith.mulf %3, %7 : vector<8x8x32xf32>
    %cst = arith.constant dense<0.000000e+00> : vector<8x8xf32>
    %9 = vector.multi_reduction <add>, %8, %cst [2] : vector<8x8x32xf32> to vector<8x8xf32>
    %c0_5 = arith.constant 0 : index
    %10 = memref.load %arg4[%c0_5] : memref<1xf32, #tpu.memory_space<smem>>
    %11 = vector.broadcast %10 : f32 to vector<8x8xf32>
    %12 = arith.addf %9, %11 : vector<8x8xf32>
    %c0_6 = arith.constant 0 : index
    %c0_7 = arith.constant 0 : index
    %13 = vector.load %arg6[%c0_6, %c0_7] : memref<8x1xf32, #tpu.memory_space<vmem>>, vector<8x1xf32>
    %cst_8 = arith.constant dense<0xFF800000> : vector<8xf32>
    %14 = vector.multi_reduction <maximumf>, %12, %cst_8 [1] : vector<8x8xf32> to vector<8xf32>
    %15 = vector.shape_cast %14 : vector<8xf32> to vector<8x1xf32>
    %16 = arith.maximumf %13, %15 : vector<8x1xf32>
    %17 = arith.subf %13, %16 : vector<8x1xf32>
    %18 = math.exp %17 : vector<8x1xf32>
    %19 = vector.broadcast %16 : vector<8x1xf32> to vector<8x8xf32>
    %20 = arith.subf %12, %19 : vector<8x8xf32>
    %21 = math.exp %20 : vector<8x8xf32>
    %c0_9 = arith.constant 0 : index
    %c0_10 = arith.constant 0 : index
    %22 = vector.load %arg7[%c0_9, %c0_10] : memref<8x1xf32, #tpu.memory_space<vmem>>, vector<8x1xf32>
    %23 = arith.mulf %18, %22 : vector<8x1xf32>
    %cst_11 = arith.constant dense<0.000000e+00> : vector<8xf32>
    %24 = vector.multi_reduction <add>, %21, %cst_11 [1] : vector<8x8xf32> to vector<8xf32>
    %25 = vector.shape_cast %24 : vector<8xf32> to vector<8x1xf32>
    %26 = arith.addf %23, %25 : vector<8x1xf32>
    %c0_12 = arith.constant 0 : index
    %c0_13 = arith.constant 0 : index
    %27 = vector.load %arg7[%c0_12, %c0_13] : memref<8x1xf32, #tpu.memory_space<vmem>>, vector<8x1xf32>
    tpu.vector_store %arg7[%c0_12, %c0_13], %26 {strides = array<i32>} : memref<8x1xf32, #tpu.memory_space<vmem>>, vector<8x1xf32>,
    %c0_14 = arith.constant 0 : index
    %c0_15 = arith.constant 0 : index
    %28 = vector.load %arg8[%c0_14, %c0_15] : memref<8x32xf32, #tpu.memory_space<vmem>>, vector<8x32xf32>
    %29 = vector.broadcast %18 : vector<8x1xf32> to vector<8x32xf32>
    %30 = arith.mulf %29, %28 : vector<8x32xf32>
    %31 = vector.shape_cast %21 : vector<8x8xf32> to vector<8x8x1xf32>
    %32 = vector.broadcast %31 : vector<8x8x1xf32> to vector<8x8x32xf32>
    %33 = arith.mulf %32, %3 : vector<8x8x32xf32>
    %cst_16 = arith.constant dense<0.000000e+00> : vector<8x32xf32>
    %34 = vector.multi_reduction <add>, %33, %cst_16 [1] : vector<8x8x32xf32> to vector<8x32xf32>
    %35 = arith.addf %30, %34 : vector<8x32xf32>
    %c0_17 = arith.constant 0 : index
    %c0_18 = arith.constant 0 : index
    %36 = vector.load %arg8[%c0_17, %c0_18] : memref<8x32xf32, #tpu.memory_space<vmem>>, vector<8x32xf32>
    tpu.vector_store %arg8[%c0_17, %c0_18], %35 {strides = array<i32>} : memref<8x32xf32, #tpu.memory_space<vmem>>, vector<8x32xf32>,
    %c0_19 = arith.constant 0 : index
    %c0_20 = arith.constant 0 : index
    %37 = vector.load %arg6[%c0_19, %c0_20] : memref<8x1xf32, #tpu.memory_space<vmem>>, vector<8x1xf32>
    tpu.vector_store %arg6[%c0_19, %c0_20], %16 {strides = array<i32>} : memref<8x1xf32, #tpu.memory_space<vmem>>, vector<8x1xf32>,
    %c0_i32_21 = arith.constant 0 : i32
    %38 = arith.cmpi eq, %arg1, %c0_i32_21 : i32
    %39 = arith.extui %38 : i1 to i32
    %c0_i32_22 = arith.constant 0 : i32
    %40 = arith.cmpi ne, %39, %c0_i32_22 : i32
    scf.if %40 {
      %c0_23 = arith.constant 0 : index
      %c0_24 = arith.constant 0 : index
      %41 = vector.load %arg8[%c0_23, %c0_24] : memref<8x32xf32, #tpu.memory_space<vmem>>, vector<8x32xf32>
      %c0_25 = arith.constant 0 : index
      %c0_26 = arith.constant 0 : index
      %42 = vector.load %arg7[%c0_25, %c0_26] : memref<8x1xf32, #tpu.memory_space<vmem>>, vector<8x1xf32>
      %cst_27 = arith.constant 1.000000e+00 : f32
      %43 = vector.broadcast %cst_27 : f32 to vector<8x1xf32>
      %44 = arith.divf %43, %42 : vector<8x1xf32>
      %45 = vector.broadcast %44 : vector<8x1xf32> to vector<8x32xf32>
      %46 = arith.mulf %41, %45 : vector<8x32xf32>
      %c0_28 = arith.constant 0 : index
      %c0_29 = arith.constant 0 : index
      %47 = vector.load %arg5[%c0_28, %c0_29] : memref<8x32xf32, #tpu.memory_space<vmem>>, vector<8x32xf32>
      tpu.vector_store %arg5[%c0_28, %c0_29], %46 {strides = array<i32>} : memref<8x32xf32, #tpu.memory_space<vmem>>, vector<8x32xf32>,
    } else {
    }
    return
  }
  func.func @transform_0(%arg0: i32, %arg1: i32) -> (i32, i32, i32) {
    %c0_i32 = arith.constant 0 : i32
    %c0_i32_0 = arith.constant 0 : i32
    return %arg0, %arg1, %c0_i32 : i32, i32, i32
  }
  func.func @transform_1(%arg0: i32, %arg1: i32) -> (i32, i32) {
    %c0_i32 = arith.constant 0 : i32
    %c0_i32_0 = arith.constant 0 : i32
    %c0_i32_1 = arith.constant 0 : i32
    return %c0_i32, %c0_i32_0 : i32, i32
  }
  func.func @transform_2(%arg0: i32, %arg1: i32) -> i32 {
    %c0_i32 = arith.constant 0 : i32
    %c0_i32_0 = arith.constant 0 : i32
    return %c0_i32 : i32
  }
  func.func @transform_3(%arg0: i32, %arg1: i32) -> (i32, i32) {
    %c0_i32 = arith.constant 0 : i32
    %c0_i32_0 = arith.constant 0 : i32
    return %arg0, %c0_i32 : i32, i32
  }
}

</mosaic_0001>

<llo_original>
// kernel: tpu_custom_call.1
$region0: #{tpu_custom_call.1}
  #allocation0 [shape = 'u32[]', space=smem, size = 0x4, offset = 0x4, fixed_abs, tag = 'smem constant byte address 0x4 - core index']
  #allocation1 [shape = 'u32[144,128]{1,0:T(1,128)}', space=vmem, size = 0x12000, scoped, tag = 'internal scratch']
  #allocation2 [shape = 'f32[8,1]{1,0:T(8,128)}', space=vmem, size = 0x1000, scoped, tag = 'scratch operand']
  #allocation3 [shape = 'f32[8,1]{1,0:T(8,128)}', space=vmem, size = 0x1000, scoped, tag = 'scratch operand']
  #allocation4 [shape = 'f32[8,32]{1,0:T(8,128)}', space=vmem, size = 0x1000, scoped, tag = 'scratch operand']
  #allocation5 [shape = 'f32[1]{0:T(128)S(6)}', space=smem, size = 0x200, scoped, tag = 'scoped memory for tpu_custom_call.1']
  %s0 = inlined_call_operand.hbm [shape: f32[2,8,32], index: 0, kind: input, shape index: {}]
  %s1 = inlined_call_operand.vmem [shape: f32[1,32], index: 1, kind: input, shape index: {}]
  %s2 = inlined_call_operand.<no memory space> [shape: f32[1], index: 2, kind: input, shape index: {}]
  %s3 = inlined_call_operand.hbm [shape: f32[2,32], index: 3, kind: output, shape index: {}]
  %s4 = sld [smem:[#allocation0]]
  $region34: #{tpu_custom_call.1} parent=0
    _
  %s6 = ssub.s32 1, %s4
  %s7 = scalar_select 0, %s6, %s4
  %8 = sst [smem:[#allocation5]] %s2
  $region1: #{tpu_custom_call.1} parent=0
    #allocation6 [shape = 'u8[32768]{0}', space=vmem, size = 0x8000, scoped, tag = 'input window, operand 0, single buffered']
    #allocation7 [shape = 's32[1]{0}', space=sflag, size = 0x4, scoped, tag = 'scoped memory for tpu_custom_call.1']
    #allocation8 [shape = 's32[1]{0}', space=sflag, size = 0x4, scoped, tag = 'scoped memory for tpu_custom_call.1']
    #allocation9 [shape = 'u8[4096]{0}', space=vmem, size = 0x1000, scoped, tag = 'output window, operand 0, single buffered']
    %9 = vsyncpa [#allocation7], 0
    %10 = vsyncpa [#allocation8], 0
    // Predicated region
    $region2: #{tpu_custom_call.1} parent=1 // pred_check
      _
    $region3: #{tpu_custom_call.1} parent=1 // pred_check_branch
      %12 = sbr.rel (0) target = $region5
    $region4: #{tpu_custom_call.1} parent=1 // pred_region
      %s14 = ssub.s32 1024, 256
      %15 = vsyncadd [#allocation7], %s14
      %s16 = sshll.u32 [#allocation6], 4
      %s17 = int_to_ptr.vmem [resolvable:$true] %s16
      %22 = dma.hbm_to_vmem [thread:$0]  %s0, 256, %s17, [#allocation7], 128, 128, 8
    $region5: #{tpu_custom_call.1} parent=1 // pred_fallthru
      _
    // Predicated region
    $region6: #{tpu_custom_call.1} parent=1 // pred_check
      _
    $region7: #{tpu_custom_call.1} parent=1 // pred_check_branch
      %24 = sbr.rel (0) target = $region9
    $region8: #{tpu_custom_call.1} parent=1 // pred_region
      _
    $region9: #{tpu_custom_call.1} parent=1 // pred_fallthru
      _
    // Predicated region
    $region10: #{tpu_custom_call.1} parent=1 // pred_check
      _
    $region11: #{tpu_custom_call.1} parent=1 // pred_check_branch
      %26 = sbr.rel (0) target = $region13
    $region12: #{tpu_custom_call.1} parent=1 // pred_region
      _
    $region13: #{tpu_custom_call.1} parent=1 // pred_fallthru
      _
    // Predicated region
    $region14: #{tpu_custom_call.1} parent=1 // pred_check
      _
    $region15: #{tpu_custom_call.1} parent=1 // pred_check_branch
      %28 = sbr.rel (0) target = $region17
    $region16: #{tpu_custom_call.1} parent=1 // pred_region
      %29 = dma.done [#allocation7], 1024
    $region17: #{tpu_custom_call.1} parent=1 // pred_fallthru
      _
    %p30 = scmp.eq.s32.totalorder 0, 0
    // Predicated region
    $region18: #{tpu_custom_call.1} parent=1 // pred_check
      %p31 = pneg %p30
    $region19: #{tpu_custom_call.1} parent=1 // pred_check_branch
      %33 = sbr.rel (%p31) target = $region21
    $region20: #{tpu_custom_call.1} parent=1 // pred_region
      %vm34 = vcmask 7168
      %35 = vst.msk [vmem:[#allocation2] sm:$0xff] %vm34, -inf
      %36 = vst.msk [vmem:[#allocation3] sm:$0xff] %vm34, 0.0
      %vm37 = vcmask 261120
      %38 = vst.msk [vmem:[#allocation4] sm:$0xff] %vm37, 0.0
    $region21: #{tpu_custom_call.1} parent=1 // pred_fallthru
      _
    %v39 = vld [vmem:[#allocation6] sm:$0xff]
    %v40 = vld [vmem:[#allocation6 + $0x8] sm:$0xff]
    %v41 = vld [vmem:[#allocation6 + $0x10] sm:$0xff]
    %v42 = vld [vmem:[#allocation6 + $0x18] sm:$0xff]
    %v43 = vld [vmem:[#allocation6 + $0x20] sm:$0xff]
    %v44 = vld [vmem:[#allocation6 + $0x28] sm:$0xff]
    %v45 = vld [vmem:[#allocation6 + $0x30] sm:$0xff]
    %v46 = vld [vmem:[#allocation6 + $0x38] sm:$0xff]
    %v47 = vld [vmem:[%s1] sm:$0x1]
    %v49 = vlaneseq
    %v50 = vshrl.u32 %v49, 7
    %v51 = vsub.s32 0, %v50
    %v52 = vrot.slane %v47, %v51
    %v54 = vmul.f32 %v39, %v52
    %v55 = vmul.f32 %v40, %v52
    %v56 = vmul.f32 %v41, %v52
    %v57 = vmul.f32 %v42, %v52
    %v58 = vmul.f32 %v43, %v52
    %v59 = vmul.f32 %v44, %v52
    %v60 = vmul.f32 %v45, %v52
    %v61 = vmul.f32 %v46, %v52
    %vm62 = vcmask 261120
    %v63 = vsel %vm62, %v54, 0.0
    %64 = vadd.xlane.f32.xlu0 %v63
    %v65 = vpop.xlane.xlu0 %64
    %v66 = vsel %vm62, %v55, 0.0
    %67 = vadd.xlane.f32.xlu0 %v66
    %v68 = vpop.xlane.xlu0 %67
    %v69 = vsel %vm62, %v56, 0.0
    %70 = vadd.xlane.f32.xlu0 %v69
    %v71 = vpop.xlane.xlu0 %70
    %v72 = vsel %vm62, %v57, 0.0
    %73 = vadd.xlane.f32.xlu0 %v72
    %v74 = vpop.xlane.xlu0 %73
    %v75 = vsel %vm62, %v58, 0.0
    %76 = vadd.xlane.f32.xlu0 %v75
    %v77 = vpop.xlane.xlu0 %76
    %v78 = vsel %vm62, %v59, 0.0
    %79 = vadd.xlane.f32.xlu0 %v78
    %v80 = vpop.xlane.xlu0 %79
    %v81 = vsel %vm62, %v60, 0.0
    %82 = vadd.xlane.f32.xlu0 %v81
    %v83 = vpop.xlane.xlu0 %82
    %v84 = vsel %vm62, %v61, 0.0
    %85 = vadd.xlane.f32.xlu0 %v84
    %v86 = vpop.xlane.xlu0 %85
    %s87 = sld [smem:[#allocation5]]
    %v88 = vstv %s87
    %v89 = vadd.f32 %v65, %v88
    %v90 = vadd.f32 %v68, %v88
    %v91 = vadd.f32 %v71, %v88
    %v92 = vadd.f32 %v74, %v88
    %v93 = vadd.f32 %v77, %v88
    %v94 = vadd.f32 %v80, %v88
    %v95 = vadd.f32 %v83, %v88
    %v96 = vadd.f32 %v86, %v88
    %v97 = vld [vmem:[#allocation2] sm:$0xff]
    %v106 = vlaneseq
    %v107 = vand.u32 %v106, 127
    %v108 = vlaneseq
    %v109 = vshrl.u32 %v108, 7
    %v110 = vsub.s32 %v107, %v109
    %v111 = vrot.slane %v89, %v110
    %v112 = vlaneseq
    %v113 = vshrl.u32 %v112, 7
    %v114 = vsub.s32 %v107, %v113
    %v115 = vrot.slane %v90, %v114
    %v116 = vlaneseq
    %v117 = vshrl.u32 %v116, 7
    %v118 = vsub.s32 %v107, %v117
    %v119 = vrot.slane %v91, %v118
    %v120 = vlaneseq
    %v121 = vshrl.u32 %v120, 7
    %v122 = vsub.s32 %v107, %v121
    %v123 = vrot.slane %v92, %v122
    %v124 = vlaneseq
    %v125 = vshrl.u32 %v124, 7
    %v126 = vsub.s32 %v107, %v125
    %v127 = vrot.slane %v93, %v126
    %v128 = vlaneseq
    %v129 = vshrl.u32 %v128, 7
    %v130 = vsub.s32 %v107, %v129
    %v131 = vrot.slane %v94, %v130
    %v132 = vlaneseq
    %v133 = vshrl.u32 %v132, 7
    %v134 = vsub.s32 %v107, %v133
    %v135 = vrot.slane %v95, %v134
    %v136 = vlaneseq
    %v137 = vshrl.u32 %v136, 7
    %v138 = vsub.s32 %v107, %v137
    %v139 = vrot.slane %v96, %v138
    %vm140 = vcmask 1041409
    %v141 = vsel %vm140, %v115, %v111
    %vm142 = vcmask 1042434
    %v143 = vsel %vm142, %v119, %v141
    %vm144 = vcmask 1043459
    %v145 = vsel %vm144, %v123, %v143
    %vm146 = vcmask 1044484
    %v147 = vsel %vm146, %v127, %v145
    %vm148 = vcmask 1045509
    %v149 = vsel %vm148, %v131, %v147
    %vm150 = vcmask 1046534
    %v151 = vsel %vm150, %v135, %v149
    %vm152 = vcmask 1047559
    %v153 = vsel %vm152, %v139, %v151
    %vm155 = vcmask 64512
    %v156 = vsel %vm155, %v153, -inf
    %157 = vmax.xlane.f32.xlu0 %v156
    %v158 = vpop.xlane.xlu0 %157
    %v159 = vmax.f32 %v97, %v158
    %v160 = vsub.f32 %v97, %v159
    %v161 = vmul.f32 %v160, 1.442695
    %v162 = vpow.pop %v161
    %164 = vset.pattern.permute.xlu0 0
    %165 = vperm.xlu0 %164, %v159
    %v166 = vpop.permute.xlu0 %165
    %v167 = vlaneseq
    %v168 = vshrl.u32 %v167, 7
    %v169 = vsub.s32 0, %v168
    %v170 = vrot.slane %v166, %v169
    %v171 = vlaneseq
    %v172 = vshrl.u32 %v171, 7
    %v173 = vsub.s32 1, %v172
    %v174 = vrot.slane %v166, %v173
    %v175 = vlaneseq
    %v176 = vshrl.u32 %v175, 7
    %v177 = vsub.s32 2, %v176
    %v178 = vrot.slane %v166, %v177
    %v179 = vlaneseq
    %v180 = vshrl.u32 %v179, 7
    %v181 = vsub.s32 3, %v180
    %v182 = vrot.slane %v166, %v181
    %v183 = vlaneseq
    %v184 = vshrl.u32 %v183, 7
    %v185 = vsub.s32 4, %v184
    %v186 = vrot.slane %v166, %v185
    %v187 = vlaneseq
    %v188 = vshrl.u32 %v187, 7
    %v189 = vsub.s32 5, %v188
    %v190 = vrot.slane %v166, %v189
    %v191 = vlaneseq
    %v192 = vshrl.u32 %v191, 7
    %v193 = vsub.s32 6, %v192
    %v194 = vrot.slane %v166, %v193
    %v195 = vlaneseq
    %v196 = vshrl.u32 %v195, 7
    %v197 = vsub.s32 7, %v196
    %v198 = vrot.slane %v166, %v197
    %v207 = vsub.f32 %v89, %v170
    %v208 = vsub.f32 %v90, %v174
    %v209 = vsub.f32 %v91, %v178
    %v210 = vsub.f32 %v92, %v182
    %v211 = vsub.f32 %v93, %v186
    %v212 = vsub.f32 %v94, %v190
    %v213 = vsub.f32 %v95, %v194
    %v214 = vsub.f32 %v96, %v198
    %v215 = vmul.f32 %v207, 1.442695
    %v216 = vpow.pop %v215
    %v217 = vmul.f32 %v208, 1.442695
    %v218 = vpow.pop %v217
    %v219 = vmul.f32 %v209, 1.442695
    %v220 = vpow.pop %v219
    %v221 = vmul.f32 %v210, 1.442695
    %v222 = vpow.pop %v221
    %v223 = vmul.f32 %v211, 1.442695
    %v224 = vpow.pop %v223
    %v225 = vmul.f32 %v212, 1.442695
    %v226 = vpow.pop %v225
    %v227 = vmul.f32 %v213, 1.442695
    %v228 = vpow.pop %v227
    %v229 = vmul.f32 %v214, 1.442695
    %v230 = vpow.pop %v229
    %v231 = vld [vmem:[#allocation3] sm:$0xff]
    %v232 = vmul.f32 %v162, %v231
    %241 = vset.pattern.permute.xlu0 0
    %242 = vperm.xlu0 %241, %v216
    %v243 = vpop.permute.xlu0 %242
    %244 = vset.pattern.permute.xlu0 0
    %245 = vperm.xlu0 %244, %v218
    %v246 = vpop.permute.xlu0 %245
    %247 = vset.pattern.permute.xlu0 0
    %248 = vperm.xlu0 %247, %v220
    %v249 = vpop.permute.xlu0 %248
    %250 = vset.pattern.permute.xlu0 0
    %251 = vperm.xlu0 %250, %v222
    %v252 = vpop.permute.xlu0 %251
    %253 = vset.pattern.permute.xlu0 0
    %254 = vperm.xlu0 %253, %v224
    %v255 = vpop.permute.xlu0 %254
    %256 = vset.pattern.permute.xlu0 0
    %257 = vperm.xlu0 %256, %v226
    %v258 = vpop.permute.xlu0 %257
    %259 = vset.pattern.permute.xlu0 0
    %260 = vperm.xlu0 %259, %v228
    %v261 = vpop.permute.xlu0 %260
    %262 = vset.pattern.permute.xlu0 0
    %263 = vperm.xlu0 %262, %v230
    %v264 = vpop.permute.xlu0 %263
    %v265 = vlaneseq
    %v266 = vshrl.u32 %v265, 7
    %v267 = vsub.s32 %v107, %v266
    %v268 = vrot.slane %v243, %v267
    %v269 = vlaneseq
    %v270 = vshrl.u32 %v269, 7
    %v271 = vsub.s32 %v107, %v270
    %v272 = vrot.slane %v246, %v271
    %v273 = vlaneseq
    %v274 = vshrl.u32 %v273, 7
    %v275 = vsub.s32 %v107, %v274
    %v276 = vrot.slane %v249, %v275
    %v277 = vlaneseq
    %v278 = vshrl.u32 %v277, 7
    %v279 = vsub.s32 %v107, %v278
    %v280 = vrot.slane %v252, %v279
    %v281 = vlaneseq
    %v282 = vshrl.u32 %v281, 7
    %v283 = vsub.s32 %v107, %v282
    %v284 = vrot.slane %v255, %v283
    %v285 = vlaneseq
    %v286 = vshrl.u32 %v285, 7
    %v287 = vsub.s32 %v107, %v286
    %v288 = vrot.slane %v258, %v287
    %v289 = vlaneseq
    %v290 = vshrl.u32 %v289, 7
    %v291 = vsub.s32 %v107, %v290
    %v292 = vrot.slane %v261, %v291
    %v293 = vlaneseq
    %v294 = vshrl.u32 %v293, 7
    %v295 = vsub.s32 %v107, %v294
    %v296 = vrot.slane %v264, %v295
    %v297 = vsel %vm140, %v272, %v268
    %v298 = vsel %vm142, %v276, %v297
    %v299 = vsel %vm144, %v280, %v298
    %v300 = vsel %vm146, %v284, %v299
    %v301 = vsel %vm148, %v288, %v300
    %v302 = vsel %vm150, %v292, %v301
    %v303 = vsel %vm152, %v296, %v302
    %v305 = vsel %vm155, %v303, 0.0
    %306 = vadd.xlane.f32.xlu0 %v305
    %v307 = vpop.xlane.xlu0 %306
    %v308 = vadd.f32 %v232, %v307
    %vm309 = vcmask 7168
    %310 = vst.msk [vmem:[#allocation3] sm:$0xff] %vm309, %v308
    %v311 = vld [vmem:[#allocation4] sm:$0xff]
    %313 = vset.pattern.permute.xlu0 0
    %314 = vperm.xlu0 %313, %v162
    %v315 = vpop.permute.xlu0 %314
    %v317 = vmul.f32 %v315, %v311
    %v326 = vmul.f32 %v243, %v39
    %v327 = vmul.f32 %v246, %v40
    %v328 = vmul.f32 %v249, %v41
    %v329 = vmul.f32 %v252, %v42
    %v330 = vmul.f32 %v255, %v43
    %v331 = vmul.f32 %v258, %v44
    %v332 = vmul.f32 %v261, %v45
    %v333 = vmul.f32 %v264, %v46
    %v334 = vsel %vm62, %v326, 0.0
    %v335 = vrot.slane %v334, 4
    %v336 = vadd.f32 %v334, %v335
    %v337 = vrot.slane %v336, 2
    %v338 = vadd.f32 %v336, %v337
    %v339 = vrot.slane %v338, 1
    %v340 = vadd.f32 %v338, %v339
    %v341 = vsel %vm62, %v327, 0.0
    %v342 = vrot.slane %v341, 4
    %v343 = vadd.f32 %v341, %v342
    %v344 = vrot.slane %v343, 2
    %v345 = vadd.f32 %v343, %v344
    %v346 = vrot.slane %v345, 1
    %v347 = vadd.f32 %v345, %v346
    %v348 = vsel %vm62, %v328, 0.0
    %v349 = vrot.slane %v348, 4
    %v350 = vadd.f32 %v348, %v349
    %v351 = vrot.slane %v350, 2
    %v352 = vadd.f32 %v350, %v351
    %v353 = vrot.slane %v352, 1
    %v354 = vadd.f32 %v352, %v353
    %v355 = vsel %vm62, %v329, 0.0
    %v356 = vrot.slane %v355, 4
    %v357 = vadd.f32 %v355, %v356
    %v358 = vrot.slane %v357, 2
    %v359 = vadd.f32 %v357, %v358
    %v360 = vrot.slane %v359, 1
    %v361 = vadd.f32 %v359, %v360
    %v362 = vsel %vm62, %v330, 0.0
    %v363 = vrot.slane %v362, 4
    %v364 = vadd.f32 %v362, %v363
    %v365 = vrot.slane %v364, 2
    %v366 = vadd.f32 %v364, %v365
    %v367 = vrot.slane %v366, 1
    %v368 = vadd.f32 %v366, %v367
    %v369 = vsel %vm62, %v331, 0.0
    %v370 = vrot.slane %v369, 4
    %v371 = vadd.f32 %v369, %v370
    %v372 = vrot.slane %v371, 2
    %v373 = vadd.f32 %v371, %v372
    %v374 = vrot.slane %v373, 1
    %v375 = vadd.f32 %v373, %v374
    %v376 = vsel %vm62, %v332, 0.0
    %v377 = vrot.slane %v376, 4
    %v378 = vadd.f32 %v376, %v377
    %v379 = vrot.slane %v378, 2
    %v380 = vadd.f32 %v378, %v379
    %v381 = vrot.slane %v380, 1
    %v382 = vadd.f32 %v380, %v381
    %v383 = vsel %vm62, %v333, 0.0
    %v384 = vrot.slane %v383, 4
    %v385 = vadd.f32 %v383, %v384
    %v386 = vrot.slane %v385, 2
    %v387 = vadd.f32 %v385, %v386
    %v388 = vrot.slane %v387, 1
    %v389 = vadd.f32 %v387, %v388
    %v398 = vsel %vm140, %v347, %v340
    %v399 = vsel %vm142, %v354, %v398
    %v400 = vsel %vm144, %v361, %v399
    %v401 = vsel %vm146, %v368, %v400
    %v402 = vsel %vm148, %v375, %v401
    %v403 = vsel %vm150, %v382, %v402
    %v404 = vsel %vm152, %v389, %v403
    %v406 = vadd.f32 %v317, %v404
    %407 = vst.msk [vmem:[#allocation4] sm:$0xff] %vm62, %v406
    %408 = vst.msk [vmem:[#allocation2] sm:$0xff] %vm309, %v159
    // Predicated region
    $region22: #{tpu_custom_call.1} parent=1 // pred_check
      %p409 = pneg %p30
    $region23: #{tpu_custom_call.1} parent=1 // pred_check_branch
      %411 = sbr.rel (%p409) target = $region25
    $region24: #{tpu_custom_call.1} parent=1 // pred_region
      %v412 = vld [vmem:[#allocation4] sm:$0xff]
      %v413 = vld [vmem:[#allocation3] sm:$0xff]
      %v414 = vrcp.pop %v413
      %v415 = vmul.f32 1.0, %v414
      %417 = vset.pattern.permute.xlu0 0
      %418 = vperm.xlu0 %417, %v415
      %v419 = vpop.permute.xlu0 %418
      %v421 = vmul.f32 %v412, %v419
      %422 = vst.msk [vmem:[#allocation9] sm:$0xff] %vm62, %v421
    $region25: #{tpu_custom_call.1} parent=1 // pred_fallthru
      _
    // Predicated region
    $region26: #{tpu_custom_call.1} parent=1 // pred_check
      _
    $region27: #{tpu_custom_call.1} parent=1 // pred_check_branch
      %424 = sbr.rel (0) target = $region29
    $region28: #{tpu_custom_call.1} parent=1 // pred_region
      %s426 = ssub.s32 128, 32
      %427 = vsyncadd [#allocation8], %s426
      %s428 = sshll.u32 [#allocation9], 4
      %s429 = int_to_ptr.vmem [resolvable:$true] %s428
      %434 = dma.vmem_to_hbm [thread:$0]  %s429, 32, %s3, [#allocation8], 32, 32, 2
    $region29: #{tpu_custom_call.1} parent=1 // pred_fallthru
      _
    // Predicated region
    $region30: #{tpu_custom_call.1} parent=1 // pred_check
      _
    $region31: #{tpu_custom_call.1} parent=1 // pred_check_branch
      %436 = sbr.rel (0) target = $region33
    $region32: #{tpu_custom_call.1} parent=1 // pred_region
      %437 = dma.done [#allocation8], 128
    $region33: #{tpu_custom_call.1} parent=1 // pred_fallthru
      _
    %438 = vsyncpa [#allocation7], 1
    %439 = vsyncpa [#allocation8], 1

</llo_original>
